<compile_context>
chip_gen: v7x
topology: tpu7x:2x2x1
jax: 0.10.0
libtpu: 0.0.40
codegen_flags: <defaults>
</compile_context>

<pallas_src>
import functools

import jax
import jax.numpy as jnp
from jax.experimental import pallas as pl
from jax.experimental.pallas import tpu as pltpu


def rup(c, m=128):
    """Round up to a multiple (lane width by default)."""
    return ((c + m - 1) // m) * m


def _maybe_vmem_limit(need_bytes):
    """Raise the scoped-VMEM limit only when the footprint is large (big inputs)."""
    if need_bytes <= (12 << 20):
        return None     # tiny footprint: default scoped VMEM suffices on v5e/v6e/v7x
    return int(min(need_bytes * 5 // 4, 96 << 20))


# -----------------------------------------------------------------------------
# Pallas kernels
# -----------------------------------------------------------------------------


def _pw_kernel(act, x_ref, w_ref, s_ref, b_ref, o_ref):
    """Fused pointwise conv: act((x @ w) * scale + bias). bf16 MXU, f32 epilogue."""
    acc = jnp.dot(x_ref[...], w_ref[...], preferred_element_type=jnp.float32)
    acc = acc * s_ref[...] + b_ref[...]
    if act == "silu":
        acc = acc * jax.nn.sigmoid(acc)
    o_ref[...] = acc.astype(o_ref.dtype)


def _pick_tile(m, tile=256):
    """Largest x8 divisor of m that is <= tile (whole-M block only as a last resort)."""
    if m <= tile:
        return m
    t = (min(tile, m) // 8) * 8
    while t >= 8:
        if m % t == 0:
            return t
        t -= 8
    return m


def pointwise(x2d, w, scale, bias, act="silu", tile=256, out_dtype=jnp.bfloat16):
    m, kdim = x2d.shape
    n = w.shape[1]
    tm = _pick_tile(m, tile)
    return pl.pallas_call(
        functools.partial(_pw_kernel, act),
        out_shape=jax.ShapeDtypeStruct((m, n), out_dtype),
        grid=(m // tm,),
        in_specs=[
            pl.BlockSpec((tm, kdim), lambda i: (i, 0)),
            pl.BlockSpec((kdim, n), lambda i: (0, 0)),
            pl.BlockSpec((1, n), lambda i: (0, 0)),
            pl.BlockSpec((1, n), lambda i: (0, 0)),
        ],
        out_specs=pl.BlockSpec((tm, n), lambda i: (i, 0)),
        compiler_params=pltpu.CompilerParams(dimension_semantics=("parallel",)),
    )(x2d, w, scale, bias)


def _mbconv_kernel(has_exp, k, stride, bt, H, W, ho, wo, use_res, *refs):
    """Fused MBConv: batched expand -> per-image depthwise(+SE) -> batched project."""
    if has_exp:
        (x_ref, ew_ref, es_ref, eb_ref, dw_ref, ds_ref, db_ref,
         w1_ref, b1_ref, w2_ref, b2_ref, pw_ref, ps_ref, pb_ref,
         o_ref, xpad_ref, flat_ref) = refs
    else:
        (x_ref, dw_ref, ds_ref, db_ref,
         w1_ref, b1_ref, w2_ref, b2_ref, pw_ref, ps_ref, pb_ref,
         o_ref, xpad_ref, flat_ref) = refs

    p = k // 2
    Hp, Wp = H + 2 * p, W + 2 * p
    mid = xpad_ref.shape[-1]

    # Re-zero only the thin halo border strips (interior is fully rewritten below).
    zcol = jnp.zeros((bt * Hp, p, mid), jnp.float32)
    xpad_ref[:, 0:p, :] = zcol
    xpad_ref[:, p + W:Wp, :] = zcol
    zrow = jnp.zeros((p, Wp, mid), jnp.float32)
    for b in range(bt):
        xpad_ref[b * Hp:b * Hp + p, :, :] = zrow
        xpad_ref[b * Hp + p + H:(b + 1) * Hp, :, :] = zrow

    x_all = x_ref[...]                                       # (bt, H*W, in_pad) bf16
    x_flat = x_all.reshape(bt * H * W, x_all.shape[-1])

    # ---- expand 1x1 conv + BN + SiLU: one batched MXU dot (M = bt*H*W) ----
    if has_exp:
        y = jnp.dot(x_flat, ew_ref[...], preferred_element_type=jnp.float32)
        y = y * es_ref[...] + eb_ref[...]
        y = y * jax.nn.sigmoid(y)                            # SiLU (f32)
    else:
        y = x_flat.astype(jnp.float32)
    y4 = y.reshape(bt, H, W, mid)
    for b in range(bt):                                      # one slab store per image
        xpad_ref[b * Hp + p:b * Hp + p + H, p:p + W, :] = y4[b]

    # ---- depthwise conv (stride via pl.ds) + BN + SiLU + Squeeze-Excite, per image ----
    for b in range(bt):
        r0 = b * Hp
        acc = jnp.zeros((ho, wo, mid), jnp.float32)
        for i in range(k):
            for j in range(k):
                if stride == 1:
                    slab = xpad_ref[r0 + i:r0 + i + ho, j:j + wo, :]
                else:
                    slab = xpad_ref[pl.ds(r0 + i, ho, stride), pl.ds(j, wo, stride), :]
                acc = acc + slab * dw_ref[i * k + j:i * k + j + 1, :]
        acc = acc * ds_ref[...] + db_ref[...]
        acc = acc * jax.nn.sigmoid(acc)                      # SiLU

        pooled = jnp.mean(jnp.mean(acc, axis=0), axis=0, keepdims=True)     # (1, mid)
        h1 = jnp.dot(pooled.astype(jnp.bfloat16), w1_ref[...],
                     preferred_element_type=jnp.float32) + b1_ref[...]
        h1 = h1 * jax.nn.sigmoid(h1)
        gate = jax.nn.sigmoid(jnp.dot(h1.astype(jnp.bfloat16), w2_ref[...],
                                      preferred_element_type=jnp.float32) + b2_ref[...])
        acc = acc * gate                                     # (ho, wo, mid) * (1, mid)

        flat_ref[b * ho * wo:(b + 1) * ho * wo, :] = (       # one lane-dense slab store
            acc.reshape(ho * wo, mid).astype(jnp.bfloat16))

    # ---- project 1x1 conv + BN (+ residual): one batched MXU dot (M = bt*Ho*Wo) ----
    out = jnp.dot(flat_ref[...], pw_ref[...], preferred_element_type=jnp.float32)
    out = out * ps_ref[...] + pb_ref[...]
    if use_res:
        out = out + x_flat.astype(jnp.float32)
    o_ref[...] = out.reshape(bt, ho * wo, out.shape[-1]).astype(o_ref.dtype)


def mbconv(x, H, W, p):
    """x: (N, H*W, in_pad) bf16 -> (N, Ho*Wo, out_pad) bf16 via one fused kernel."""
    n = x.shape[0]
    k, stride, expand = p["k"], p["stride"], p["expand"]
    in_pad, mid_pad, out_pad = p["in_pad"], p["mid_pad"], p["out_pad"]
    pd = k // 2
    ho = (H + 2 * pd - k) // stride + 1
    wo = (W + 2 * pd - k) // stride + 1
    has_exp = expand != 1
    use_res = (stride == 1 and p["in_c"] == p["out_c"])

    # Batch several images per grid step when the spatial extent is small so the
    # expand/project dots see a reasonable M; cap unroll depth and VMEM footprint.
    per_img = ((H + 2 * pd) * (W + 2 * pd) * mid_pad * 4
               + ho * wo * mid_pad * 2
               + (H * W * in_pad + ho * wo * out_pad) * 2 * 2)
    bt_cap = max(1, (4 << 20) // max(per_img, 1))
    bt_want = max(1, min(n, 256 // max(H * W, 1), 8, bt_cap))
    bt = 1
    for d in range(bt_want, 0, -1):
        if n % d == 0:
            bt = d
            break

    args = [x]
    in_specs = [pl.BlockSpec((bt, H * W, in_pad), lambda b: (b, 0, 0))]

    def add_full(a):
        args.append(a)
        in_specs.append(pl.BlockSpec(a.shape, lambda b, _nd=a.ndim: (0,) * _nd))

    if has_exp:
        add_full(p["exp_w"]); add_full(p["exp_scale"]); add_full(p["exp_bias"])
    add_full(p["dw_w"]); add_full(p["dw_scale"]); add_full(p["dw_bias"])
    add_full(p["se_w1"]); add_full(p["se_b1"]); add_full(p["se_w2"]); add_full(p["se_b2"])
    add_full(p["proj_w"]); add_full(p["proj_scale"]); add_full(p["proj_bias"])

    wt_bytes = sum(int(a.size) * a.dtype.itemsize for a in args[1:])
    need = (bt * (H + 2 * pd) * (W + 2 * pd) * mid_pad * 4
            + bt * ho * wo * mid_pad * 2
            + 2 * (bt * (H * W * in_pad + ho * wo * out_pad) * 2 + wt_bytes))

    out = pl.pallas_call(
        functools.partial(_mbconv_kernel, has_exp, k, stride, bt, H, W, ho, wo, use_res),
        out_shape=jax.ShapeDtypeStruct((n, ho * wo, out_pad), jnp.bfloat16),
        grid=(n // bt,),
        in_specs=in_specs,
        out_specs=pl.BlockSpec((bt, ho * wo, out_pad), lambda b: (b, 0, 0)),
        scratch_shapes=[
            pltpu.VMEM((bt * (H + 2 * pd), W + 2 * pd, mid_pad), jnp.float32),  # halo
            pltpu.VMEM((bt * ho * wo, mid_pad), jnp.bfloat16),                  # proj M
        ],
        input_output_aliases=({0: 0} if use_res else {}),
        compiler_params=pltpu.CompilerParams(
            dimension_semantics=("parallel",),
            vmem_limit_bytes=_maybe_vmem_limit(need)),
    )(*args)
    return out, ho, wo


def _head_kernel(n, hw, x_ref, w_ref, s_ref, b_ref, cw_ref, cb_ref, o_ref):
    """Fused head 1x1 conv + BN + SiLU + global-average-pool + classifier (whole batch)."""
    x = x_ref[...].reshape(n * hw, x_ref.shape[-1])          # (N*HW, Cin_pad) bf16
    h = jnp.dot(x, w_ref[...], preferred_element_type=jnp.float32)
    h = h * s_ref[...] + b_ref[...]
    h = h * jax.nn.sigmoid(h)                                # SiLU, (N*HW, 1280)
    pooled = jnp.mean(h.reshape(n, hw, h.shape[-1]), axis=1)  # (N, 1280)
    logits = jnp.dot(pooled.astype(jnp.bfloat16), cw_ref[...],
                     preferred_element_type=jnp.float32) + cb_ref[...]
    o_ref[...] = logits


def head_pool_classify(x, params):
    n, hw, cin = x.shape
    cls_pad = params["cls_w"].shape[1]
    weights = [params["head_w"], params["head_scale"], params["head_bias"],
               params["cls_w"], params["cls_b"]]
    in_specs = [pl.BlockSpec((n, hw, cin), lambda i: (0, 0, 0))]
    in_specs += [pl.BlockSpec(a.shape, lambda i, _nd=a.ndim: (0,) * _nd) for a in weights]
    need = (2 * (int(x.size) * 2
                 + sum(int(a.size) * a.dtype.itemsize for a in weights)
                 + n * cls_pad * 4)
            + n * hw * 1280 * 4)
    return pl.pallas_call(
        functools.partial(_head_kernel, n, hw),
        out_shape=jax.ShapeDtypeStruct((n, cls_pad), jnp.float32),
        grid=(1,),
        in_specs=in_specs,
        out_specs=pl.BlockSpec((n, cls_pad), lambda i: (0, 0)),
        compiler_params=pltpu.CompilerParams(
            dimension_semantics=("arbitrary",),
            vmem_limit_bytes=_maybe_vmem_limit(need)),
    )(x, *weights)


# -----------------------------------------------------------------------------
# JAX glue (layout plumbing only; compute lives in the kernels above)
# -----------------------------------------------------------------------------


def im2col(x, k, stride):
    """Extract k x k patches (padding k//2) -> (N*Ho*Wo, k*k*C)."""
    n, h, w, c = x.shape
    p = k // 2
    xp = jnp.pad(x, ((0, 0), (p, p), (p, p), (0, 0)))
    ho = (h + 2 * p - k) // stride + 1
    wo = (w + 2 * p - k) // stride + 1
    cols = []
    for i in range(k):
        for j in range(k):
            cols.append(xp[:, i:i + stride * (ho - 1) + 1:stride,
                           j:j + stride * (wo - 1) + 1:stride, :])
    patches = jnp.concatenate(cols, axis=-1)
    return patches.reshape(n * ho * wo, k * k * c), (n, ho, wo)


# -----------------------------------------------------------------------------
# Parameter init (deterministic; eval-mode BN folded; lane-padded; bf16 weights)
# -----------------------------------------------------------------------------


class KeyGen:
    def __init__(self, key):
        self.key = key

    def __call__(self):
        self.key, sub = jax.random.split(self.key)
        return sub


def he(kg, shape, fan_in):
    return jax.random.normal(kg(), shape, jnp.float32) * (2.0 / fan_in) ** 0.5


def make_bn(kg, c, eps=1e-5):
    gamma = 1.0 + 0.1 * jax.random.normal(kg(), (c,), jnp.float32)
    beta = 0.1 * jax.random.normal(kg(), (c,), jnp.float32)
    mean = 0.1 * jax.random.normal(kg(), (c,), jnp.float32)
    var = 1.0 + 0.1 * jax.random.uniform(kg(), (c,), jnp.float32)
    scale = gamma * jax.lax.rsqrt(var + eps)
    return scale, beta - mean * scale


def pad_mat(a, rows, cols, dtype=jnp.bfloat16):
    return jnp.pad(a, ((0, rows - a.shape[0]), (0, cols - a.shape[1]))).astype(dtype)


def pad_vec(a, n):
    return jnp.pad(a, (0, n - a.shape[0])).reshape(1, n).astype(jnp.float32)


# EfficientNet-B0 stage config: (expand_ratio, kernel, stride, repeats, out_channels)
B0_CFG = [
    (1, 3, 1, 1, 16),
    (6, 3, 2, 2, 24),
    (6, 5, 2, 2, 40),
    (6, 3, 2, 3, 80),
    (6, 5, 1, 3, 112),
    (6, 5, 2, 4, 192),
    (6, 3, 1, 1, 320),
]
STEM_CH = 32
HEAD_CH = 1280
NUM_CLASSES = 60


def make_block(kg, in_c, out_c, k, stride, expand):
    mid = in_c * expand
    in_p, mid_p, out_p = rup(in_c), rup(mid), rup(out_c)
    p = dict(in_c=in_c, out_c=out_c, k=k, stride=stride, expand=expand,
             in_pad=in_p, mid_pad=mid_p, out_pad=out_p)
    if expand != 1:
        s, b = make_bn(kg, mid)
        p["exp_w"] = pad_mat(he(kg, (in_c, mid), in_c), in_p, mid_p)
        p["exp_scale"], p["exp_bias"] = pad_vec(s, mid_p), pad_vec(b, mid_p)
    s, b = make_bn(kg, mid)
    p["dw_w"] = pad_mat(he(kg, (k * k, mid), k * k), k * k, mid_p, dtype=jnp.float32)
    p["dw_scale"], p["dw_bias"] = pad_vec(s, mid_p), pad_vec(b, mid_p)
    cse = max(1, int(in_c * 0.25))
    cse_p = rup(cse, 8)                       # x8 pad (not x128): SE dims are tiny
    p["se_w1"] = pad_mat(he(kg, (mid, cse), mid), mid_p, cse_p)
    p["se_b1"] = pad_vec(jnp.zeros((cse,), jnp.float32), cse_p)
    p["se_w2"] = pad_mat(he(kg, (cse, mid), cse), cse_p, mid_p)
    p["se_b2"] = pad_vec(jnp.zeros((mid,), jnp.float32), mid_p)
    s, b = make_bn(kg, out_c)
    p["proj_w"] = pad_mat(he(kg, (mid, out_c), mid), mid_p, out_p)
    p["proj_scale"], p["proj_bias"] = pad_vec(s, out_p), pad_vec(b, out_p)
    return p


def init_params(key, num_classes=NUM_CLASSES):
    kg = KeyGen(key)
    params = {}
    stem_k = 3 * 3 * 3
    s, b = make_bn(kg, STEM_CH)
    params["stem_w"] = pad_mat(he(kg, (stem_k, STEM_CH), stem_k),
                               rup(stem_k, 8), rup(STEM_CH))     # K padded 27 -> 32
    params["stem_scale"] = pad_vec(s, rup(STEM_CH))
    params["stem_bias"] = pad_vec(b, rup(STEM_CH))
    blocks = []
    in_c = STEM_CH
    for expand, k, stride, repeats, out_c in B0_CFG:
        for r in range(repeats):
            blocks.append(make_block(kg, in_c, out_c, k, stride if r == 0 else 1, expand))
            in_c = out_c
    params["blocks"] = blocks
    s, b = make_bn(kg, HEAD_CH)
    params["head_w"] = pad_mat(he(kg, (in_c, HEAD_CH), in_c), rup(in_c), rup(HEAD_CH))
    params["head_scale"] = pad_vec(s, rup(HEAD_CH))
    params["head_bias"] = pad_vec(b, rup(HEAD_CH))
    bound = 1.0 / (HEAD_CH ** 0.5)
    cls_w = jax.random.uniform(kg(), (HEAD_CH, num_classes), jnp.float32, -bound, bound)
    cls_b = jax.random.uniform(kg(), (num_classes,), jnp.float32, -bound, bound)
    params["cls_w"] = pad_mat(cls_w, rup(HEAD_CH), rup(num_classes))
    params["cls_b"] = pad_vec(cls_b, rup(num_classes))
    return params


# -----------------------------------------------------------------------------
# Forward pass
# -----------------------------------------------------------------------------


def efficientnet_forward(params, x_nchw, num_classes=NUM_CLASSES):
    # NCHW (PyTorch) -> NHWC; stem 3x3 s2 conv via im2col (K padded 27->32) + fused matmul
    x = jnp.transpose(x_nchw, (0, 2, 3, 1)).astype(jnp.float32)
    cols, (n, ho, wo) = im2col(x, 3, 2)                          # (N*Ho*Wo, 27)
    kp = params["stem_w"].shape[0]
    cols = jnp.pad(cols, ((0, 0), (0, kp - cols.shape[1]))).astype(jnp.bfloat16)
    h = pointwise(cols, params["stem_w"], params["stem_scale"], params["stem_bias"],
                  act="silu")
    H, W = ho, wo
    h = h.reshape(n, H * W, params["stem_w"].shape[1])           # (N, H*W, 128) bf16
    # MBConv stages: one fused Pallas kernel per block, batched images per grid step.
    # TODO(synk): fuse consecutive same-resolution deep blocks into one pallas_call.
    for bp in params["blocks"]:
        h, H, W = mbconv(h, H, W, bp)
    # fused head conv + BN + SiLU + global-average-pool + Linear(1280, 60), whole batch
    logits = head_pool_classify(h, params)                       # (N, 128) f32
    return logits[:, :num_classes]


# -----------------------------------------------------------------------------


if __name__ == "__main__":
    key = jax.random.PRNGKey(0)
    pkey, xkey = jax.random.split(key)
    params = init_params(pkey, num_classes=NUM_CLASSES)
    # small input consistent with the module's forward (NCHW, 3 channels, /32-divisible)
    x = jax.random.normal(xkey, (2, 3, 32, 32), jnp.float32)
    out = efficientnet_forward(params, x)
    out = jax.block_until_ready(out)
    assert out.shape == (2, NUM_CLASSES), out.shape
    assert bool(jnp.all(jnp.isfinite(out)))
    print("KERNEL_OK")
</pallas_src>

<mosaic_0001>
module attributes {stable_mosaic.version = 11 : i64} {
  func.func @_pw_kernel(%arg0: i32, %arg1: memref<256x32xbf16, #tpu.memory_space<vmem>>, %arg2: memref<32x128xbf16, #tpu.memory_space<vmem>>, %arg3: memref<1x128xf32, #tpu.memory_space<vmem>>, %arg4: memref<1x128xf32, #tpu.memory_space<vmem>>, %arg5: memref<256x128xbf16, #tpu.memory_space<vmem>>) attributes {dimension_semantics = [#tpu.dimension_semantics<parallel>], iteration_bounds = array<i64: 2>, scalar_prefetch = 0 : i64, scratch_operands = 0 : i64, tpu.core_type = #tpu.core_type<tc>, window_params = [{transform_indices = @transform_0, window_bounds = array<i64: 256, 32>}, {pipeline_mode = #tpu.pipeline_mode<synchronous>, transform_indices = @transform_1, window_bounds = array<i64: 32, 128>}, {pipeline_mode = #tpu.pipeline_mode<synchronous>, transform_indices = @transform_2, window_bounds = array<i64: 1, 128>}, {pipeline_mode = #tpu.pipeline_mode<synchronous>, transform_indices = @transform_3, window_bounds = array<i64: 1, 128>}, {transform_indices = @transform_4, window_bounds = array<i64: 256, 128>}]} {
    %c0 = arith.constant 0 : index
    %c0_0 = arith.constant 0 : index
    %0 = vector.load %arg1[%c0, %c0_0] : memref<256x32xbf16, #tpu.memory_space<vmem>>, vector<256x32xbf16>
    %c0_1 = arith.constant 0 : index
    %c0_2 = arith.constant 0 : index
    %1 = vector.load %arg2[%c0_1, %c0_2] : memref<32x128xbf16, #tpu.memory_space<vmem>>, vector<32x128xbf16>
    %cst = arith.constant dense<0.000000e+00> : vector<256x128xf32>
    %2 = tpu.matmul %0, %1, %cst {dimension_numbers = #tpu.dot_dimension_numbers<[1], [0], [0], [1], [0, 0, 1, 1], [], []>} : vector<256x32xbf16>, vector<32x128xbf16>, vector<256x128xf32> -> vector<256x128xf32>
    %c0_3 = arith.constant 0 : index
    %c0_4 = arith.constant 0 : index
    %3 = vector.load %arg3[%c0_3, %c0_4] : memref<1x128xf32, #tpu.memory_space<vmem>>, vector<1x128xf32>
    %4 = vector.broadcast %3 : vector<1x128xf32> to vector<256x128xf32>
    %5 = arith.mulf %2, %4 : vector<256x128xf32>
    %c0_5 = arith.constant 0 : index
    %c0_6 = arith.constant 0 : index
    %6 = vector.load %arg4[%c0_5, %c0_6] : memref<1x128xf32, #tpu.memory_space<vmem>>, vector<1x128xf32>
    %7 = vector.broadcast %6 : vector<1x128xf32> to vector<256x128xf32>
    %8 = arith.addf %5, %7 : vector<256x128xf32>
    %9 = arith.negf %8 : vector<256x128xf32>
    %10 = math.exp %9 : vector<256x128xf32>
    %cst_7 = arith.constant 1.000000e+00 : f32
    %11 = vector.broadcast %cst_7 : f32 to vector<256x128xf32>
    %12 = arith.addf %11, %10 : vector<256x128xf32>
    %13 = arith.divf %11, %12 : vector<256x128xf32>
    %14 = arith.mulf %8, %13 : vector<256x128xf32>
    %15 = arith.truncf %14 : vector<256x128xf32> to vector<256x128xbf16>
    %c0_8 = arith.constant 0 : index
    %c0_9 = arith.constant 0 : index
    %16 = vector.load %arg5[%c0_8, %c0_9] : memref<256x128xbf16, #tpu.memory_space<vmem>>, vector<256x128xbf16>
    tpu.vector_store %arg5[%c0_8, %c0_9], %15 {strides = array<i32>} : memref<256x128xbf16, #tpu.memory_space<vmem>>, vector<256x128xbf16>,
    return
  }
  func.func @transform_0(%arg0: i32) -> (i32, i32) {
    %c0_i32 = arith.constant 0 : i32
    %c0_i32_0 = arith.constant 0 : i32
    return %arg0, %c0_i32 : i32, i32
  }
  func.func @transform_1(%arg0: i32) -> (i32, i32) {
    %c0_i32 = arith.constant 0 : i32
    %c0_i32_0 = arith.constant 0 : i32
    %c0_i32_1 = arith.constant 0 : i32
    return %c0_i32, %c0_i32_0 : i32, i32
  }
  func.func @transform_2(%arg0: i32) -> (i32, i32) {
    %c0_i32 = arith.constant 0 : i32
    %c0_i32_0 = arith.constant 0 : i32
    %c0_i32_1 = arith.constant 0 : i32
    return %c0_i32, %c0_i32_0 : i32, i32
  }
  func.func @transform_3(%arg0: i32) -> (i32, i32) {
    %c0_i32 = arith.constant 0 : i32
    %c0_i32_0 = arith.constant 0 : i32
    %c0_i32_1 = arith.constant 0 : i32
    return %c0_i32, %c0_i32_0 : i32, i32
  }
  func.func @transform_4(%arg0: i32) -> (i32, i32) {
    %c0_i32 = arith.constant 0 : i32
    %c0_i32_0 = arith.constant 0 : i32
    return %arg0, %c0_i32 : i32, i32
  }
}

</mosaic_0001>

<llo_original>
// kernel: tpu_custom_call.1
$region0: #{tpu_custom_call.1}
  #allocation0 [shape = 'u32[]', space=smem, size = 0x4, offset = 0x4, fixed_abs, tag = 'smem constant byte address 0x4 - core index']
  #allocation1 [shape = 'u32[144,128]{1,0:T(1,128)}', space=vmem, size = 0x12000, scoped, tag = 'internal scratch']
  %s0 = inlined_call_operand.vmem [shape: bf16[512,32], index: 0, kind: input, shape index: {}]
  %s1 = inlined_call_operand.vmem [shape: bf16[32,128], index: 1, kind: input, shape index: {}]
  %s2 = inlined_call_operand.vmem [shape: f32[1,128], index: 2, kind: input, shape index: {}]
  %s3 = inlined_call_operand.vmem [shape: f32[1,128], index: 3, kind: input, shape index: {}]
  %s4 = inlined_call_operand.hbm [shape: bf16[512,128], index: 4, kind: output, shape index: {}]
  %s5 = sld [smem:[#allocation0]]
  $region49: #{tpu_custom_call.1} parent=0
    _
  %s7 = ssub.s32 1, %s5
  %s8 = scalar_select 0, %s7, %s5
  $region1: #{tpu_custom_call.1} parent=0
    #allocation2 [shape = 'u8[131072]{0}', space=vmem, size = 0x20000, scoped, tag = 'output window, operand 0']
    #allocation3 [shape = 's32[2]{0}', space=sflag, size = 0x8, scoped, tag = 'scoped memory for tpu_custom_call.1']
    %9 = vsyncpa [#allocation3], 0
    %s10 = scalar_lea.sflag [#allocation3], 1
    %11 = vsyncpa %s10, 0
    loop: start=0, step=1, limit=4
    $region2: #{tpu_custom_call.1} parent=1 // loop_pre_header
      _
    $region3: #{tpu_custom_call.1} parent=1 // loop_header
      %s13 = sphi 0, %s17
      %p14 = scmp.ge.s32.totalorder %s13, 4
      %s23 = sphi 0, %s25
      %s26 = sphi 0, %s23
      %s27 = sphi 0, %s26
      %s43 = sphi 0, %s27
      %s47 = sphi 0, %s47
      %s49 = sphi 0, %s47
      %s50 = sphi 0, %s49
      %s64 = sphi 0, %s50
      %s68 = sphi 0, %s68
      %s70 = sphi 0, %s68
      %s71 = sphi 0, %s70
      %s85 = sphi 0, %s71
      %s89 = sphi 0, %s89
      %s91 = sphi 0, %s89
      %s92 = sphi 0, %s91
      %s106 = sphi 0, %s92
      %s112 = sphi 0, %s114
      %s115 = sphi 0, %s112
      %s116 = sphi 0, %s115
      %s132 = sphi 0, %s116
    $region4: #{tpu_custom_call.1} parent=1 // loop_header_branch
      %16 = sbr.rel (%p14) target = $region8
    $region5: #{tpu_custom_call.1} parent=1 // loop_body
      %s18 = ssub.s32 %s13, 1
      %s19 = ssub.s32 %s13, 2
      %s20 = sadd.s32 %s13, 1
      %s21 = ssub.s32 %s13, %s20
      %p22 = scmp.eq.s32.totalorder %s21, 0
      %s24 = sadd.s32 %s23, 1
      %s25 = scalar_select %p22, %s23, %s24
      %p28 = pneg %p22
      %p29 = scmp.eq.s32.totalorder %s13, 1
      %p30 = por %p28, %p29
      %p31 = scmp.ne.s32.totalorder %s23, %s26
      %p32 = scmp.eq.s32.totalorder %s13, 0
      %p33 = por %p31, %p32
      %p34 = scmp.ne.s32.totalorder %s23, %s26
      %p35 = scmp.eq.s32.totalorder %s18, 1
      %p36 = por %p34, %p35
      %p37 = scmp.ne.s32.totalorder %s26, %s27
      %p38 = scmp.eq.s32.totalorder %s18, 0
      %p39 = por %p37, %p38
      %p40 = scmp.ne.s32.totalorder %s26, %s27
      %p41 = scmp.eq.s32.totalorder %s19, 1
      %p42 = por %p40, %p41
      %p44 = scmp.ne.s32.totalorder %s27, %s43
      %p45 = scmp.eq.s32.totalorder %s19, 0
      %p46 = por %p44, %p45
      %s48 = sadd.s32 %s47, 1
      %p51 = scmp.eq.s32.totalorder %s13, 1
      %p52 = scmp.ne.s32.totalorder %s47, %s49
      %p53 = scmp.eq.s32.totalorder %s13, 0
      %p54 = por %p52, %p53
      %p55 = scmp.ne.s32.totalorder %s47, %s49
      %p56 = scmp.eq.s32.totalorder %s18, 1
      %p57 = por %p55, %p56
      %p58 = scmp.ne.s32.totalorder %s49, %s50
      %p59 = scmp.eq.s32.totalorder %s18, 0
      %p60 = por %p58, %p59
      %p61 = scmp.ne.s32.totalorder %s49, %s50
      %p62 = scmp.eq.s32.totalorder %s19, 1
      %p63 = por %p61, %p62
      %p65 = scmp.ne.s32.totalorder %s50, %s64
      %p66 = scmp.eq.s32.totalorder %s19, 0
      %p67 = por %p65, %p66
      %s69 = sadd.s32 %s68, 1
      %p72 = scmp.eq.s32.totalorder %s13, 1
      %p73 = scmp.ne.s32.totalorder %s68, %s70
      %p74 = scmp.eq.s32.totalorder %s13, 0
      %p75 = por %p73, %p74
      %p76 = scmp.ne.s32.totalorder %s68, %s70
      %p77 = scmp.eq.s32.totalorder %s18, 1
      %p78 = por %p76, %p77
      %p79 = scmp.ne.s32.totalorder %s70, %s71
      %p80 = scmp.eq.s32.totalorder %s18, 0
      %p81 = por %p79, %p80
      %p82 = scmp.ne.s32.totalorder %s70, %s71
      %p83 = scmp.eq.s32.totalorder %s19, 1
      %p84 = por %p82, %p83
      %p86 = scmp.ne.s32.totalorder %s71, %s85
      %p87 = scmp.eq.s32.totalorder %s19, 0
      %p88 = por %p86, %p87
      %s90 = sadd.s32 %s89, 1
      %p93 = scmp.eq.s32.totalorder %s13, 1
      %p94 = scmp.ne.s32.totalorder %s89, %s91
      %p95 = scmp.eq.s32.totalorder %s13, 0
      %p96 = por %p94, %p95
      %p97 = scmp.ne.s32.totalorder %s89, %s91
      %p98 = scmp.eq.s32.totalorder %s18, 1
      %p99 = por %p97, %p98
      %p100 = scmp.ne.s32.totalorder %s91, %s92
      %p101 = scmp.eq.s32.totalorder %s18, 0
      %p102 = por %p100, %p101
      %p103 = scmp.ne.s32.totalorder %s91, %s92
      %p104 = scmp.eq.s32.totalorder %s19, 1
      %p105 = por %p103, %p104
      %p107 = scmp.ne.s32.totalorder %s92, %s106
      %p108 = scmp.eq.s32.totalorder %s19, 0
      %p109 = por %p107, %p108
      %s110 = ssub.s32 %s13, %s20
      %p111 = scmp.eq.s32.totalorder %s110, 0
      %s113 = sadd.s32 %s112, 1
      %s114 = scalar_select %p111, %s112, %s113
      %p117 = pneg %p111
      %p118 = scmp.eq.s32.totalorder %s13, 1
      %p119 = por %p117, %p118
      %p120 = scmp.ne.s32.totalorder %s112, %s115
      %p121 = scmp.eq.s32.totalorder %s13, 0
      %p122 = por %p120, %p121
      %p123 = scmp.ne.s32.totalorder %s112, %s115
      %p124 = scmp.eq.s32.totalorder %s18, 1
      %p125 = por %p123, %p124
      %p126 = scmp.ne.s32.totalorder %s115, %s116
      %p127 = scmp.eq.s32.totalorder %s18, 0
      %p128 = por %p126, %p127
      %p129 = scmp.ne.s32.totalorder %s115, %s116
      %p130 = scmp.eq.s32.totalorder %s19, 1
      %p131 = por %p129, %p130
      %p133 = scmp.ne.s32.totalorder %s116, %s132
      %p134 = scmp.eq.s32.totalorder %s19, 0
      %p135 = por %p133, %p134
      %p136 = scmp.le.s32.totalorder 1, %s13
      %p137 = scmp.lt.s32.totalorder %s13, 3
      %p138 = pnand %p136, %p137
      %p139 = pneg %p138
      // Predicated region
      $region9: #{tpu_custom_call.1} parent=5 // pred_check
        _
      $region10: #{tpu_custom_call.1} parent=5 // pred_check_branch
        %141 = sbr.rel (%p138) target = $region12
      $region11: #{tpu_custom_call.1} parent=5 // pred_region
        %s142 = ssub.s32 %s13, 1
        // Predicated region
        $region13: #{tpu_custom_call.1} parent=11 // pred_check
          %p143 = pneg %p60
        $region14: #{tpu_custom_call.1} parent=11 // pred_check_branch
          %145 = sbr.rel (%p143) target = $region16
        $region15: #{tpu_custom_call.1} parent=11 // pred_region
          _
        $region16: #{tpu_custom_call.1} parent=11 // pred_fallthru
          _
        // Predicated region
        $region17: #{tpu_custom_call.1} parent=11 // pred_check
          %p146 = pneg %p81
        $region18: #{tpu_custom_call.1} parent=11 // pred_check_branch
          %148 = sbr.rel (%p146) target = $region20
        $region19: #{tpu_custom_call.1} parent=11 // pred_region
          _
        $region20: #{tpu_custom_call.1} parent=11 // pred_fallthru
          _
        // Predicated region
        $region21: #{tpu_custom_call.1} parent=11 // pred_check
          %p149 = pneg %p102
        $region22: #{tpu_custom_call.1} parent=11 // pred_check_branch
          %151 = sbr.rel (%p149) target = $region24
        $region23: #{tpu_custom_call.1} parent=11 // pred_region
          _
        $region24: #{tpu_custom_call.1} parent=11 // pred_fallthru
          _
      $region12: #{tpu_custom_call.1} parent=5 // pred_fallthru
        _
      %p152 = scmp.lt.s32.totalorder %s13, 2
      // Predicated region
      $region25: #{tpu_custom_call.1} parent=5 // pred_check
        %p153 = pneg %p152
      $region26: #{tpu_custom_call.1} parent=5 // pred_check_branch
        %155 = sbr.rel (%p153) target = $region28
      $region27: #{tpu_custom_call.1} parent=5 // pred_region
        // Predicated region
        $region29: #{tpu_custom_call.1} parent=27 // pred_check
          %p156 = pneg %p33
        $region30: #{tpu_custom_call.1} parent=27 // pred_check_branch
          %158 = sbr.rel (%p156) target = $region32
        $region31: #{tpu_custom_call.1} parent=27 // pred_region
          %s159 = smul.u32 32, %s13
          %p160 = scmp.lt.s32.totalorder %s159, 63
          %s161 = scalar_select %p160, %s159, 63
          %s162 = smul.addr %s161, 4
          %s163 = scalar_lea.vmem %s0, %s162
          %s164 = smul.u32 32, %s13
        $region32: #{tpu_custom_call.1} parent=27 // pred_fallthru
          _
      $region28: #{tpu_custom_call.1} parent=5 // pred_fallthru
        _
      %p165 = scmp.le.s32.totalorder 1, %s13
      %p166 = scmp.lt.s32.totalorder %s13, 3
      %p167 = pnand %p165, %p166
      %p168 = pneg %p167
      // Predicated region
      $region33: #{tpu_custom_call.1} parent=5 // pred_check
        _
      $region34: #{tpu_custom_call.1} parent=5 // pred_check_branch
        %170 = sbr.rel (%p167) target = $region36
      $region35: #{tpu_custom_call.1} parent=5 // pred_region
        %s171 = ssub.s32 %s13, 1
        %s172 = smul.u32 32, %s18
        %p173 = scmp.lt.s32.totalorder %s172, 63
        %s174 = scalar_select %p173, %s172, 63
        %s175 = smul.addr %s174, 4
        %s176 = scalar_lea.vmem %s0, %s175
        %p177 = pneg %p39
        %p178 = pneg %p36
        %p179 = pneg %p60
        %p180 = pneg %p57
        %p181 = pneg %p81
        %p182 = pneg %p78
        %p183 = pneg %p102
        %p184 = pneg %p99
        %p185 = pneg %p128
        %p186 = pneg %p125
        %s187 = sand.u32 %s115, 1
        %s188 = scalar_lea.sflag [#allocation3], %s187
        %s189 = sand.u32 %s115, 1
        %s190 = smul.addr %s189, 128
        %s191 = scalar_lea.vmem [#allocation2], %s190
        %s192 = smul.u32 32, %s18
        %p193 = scmp.lt.s32.totalorder %s192, 63
        %s194 = scalar_select %p193, %s192, 63
        %s195 = smul.addr %s194, 4
        %s196 = scalar_lea.vmem %s0, %s195
        %s197 = smul.u32 32, %s18
        %s198 = smul.u32 32, %s18
        %v200 = vld [vmem:[%s196] sm:$0xf]
        %v201 = vld [vmem:[%s196 + $0x4] sm:$0xf]
        %v202 = vld [vmem:[%s196 + $0x8] sm:$0xf]
        %v203 = vld [vmem:[%s196 + $0xc] sm:$0xf]
        %v204 = vld [vmem:[%s196 + $0x10] sm:$0xf]
        %v205 = vld [vmem:[%s196 + $0x14] sm:$0xf]
        %v206 = vld [vmem:[%s196 + $0x18] sm:$0xf]
        %v207 = vld [vmem:[%s196 + $0x1c] sm:$0xf]
        %v208 = vld [vmem:[%s196 + $0x20] sm:$0xf]
        %v209 = vld [vmem:[%s196 + $0x24] sm:$0xf]
        %v210 = vld [vmem:[%s196 + $0x28] sm:$0xf]
        %v211 = vld [vmem:[%s196 + $0x2c] sm:$0xf]
        %v212 = vld [vmem:[%s196 + $0x30] sm:$0xf]
        %v213 = vld [vmem:[%s196 + $0x34] sm:$0xf]
        %v214 = vld [vmem:[%s196 + $0x38] sm:$0xf]
        %v215 = vld [vmem:[%s196 + $0x3c] sm:$0xf]
        %v216 = vld [vmem:[%s196 + $0x40] sm:$0xf]
        %v217 = vld [vmem:[%s196 + $0x44] sm:$0xf]
        %v218 = vld [vmem:[%s196 + $0x48] sm:$0xf]
        %v219 = vld [vmem:[%s196 + $0x4c] sm:$0xf]
        %v220 = vld [vmem:[%s196 + $0x50] sm:$0xf]
        %v221 = vld [vmem:[%s196 + $0x54] sm:$0xf]
        %v222 = vld [vmem:[%s196 + $0x58] sm:$0xf]
        %v223 = vld [vmem:[%s196 + $0x5c] sm:$0xf]
        %v224 = vld [vmem:[%s196 + $0x60] sm:$0xf]
        %v225 = vld [vmem:[%s196 + $0x64] sm:$0xf]
        %v226 = vld [vmem:[%s196 + $0x68] sm:$0xf]
        %v227 = vld [vmem:[%s196 + $0x6c] sm:$0xf]
        %v228 = vld [vmem:[%s196 + $0x70] sm:$0xf]
        %v229 = vld [vmem:[%s196 + $0x74] sm:$0xf]
        %v230 = vld [vmem:[%s196 + $0x78] sm:$0xf]
        %v231 = vld [vmem:[%s196 + $0x7c] sm:$0xf]
        %v232 = vld [vmem:[%s1] sm:$0xf]
        %v233 = vld [vmem:[%s1 + $0x4] sm:$0xf]
        %v234 = vld [vmem:[%s1 + $0x8] sm:$0xf]
        %v235 = vld [vmem:[%s1 + $0xc] sm:$0xf]
        %v268 = vunpack.c.l.b16 %v200
        %v269 = vunpack.c.l.b16 %v201
        %v270 = vunpack.c.l.b16 %v202
        %v271 = vunpack.c.l.b16 %v203
        %v272 = vunpack.c.l.b16 %v204
        %v273 = vunpack.c.l.b16 %v205
        %v274 = vunpack.c.l.b16 %v206
        %v275 = vunpack.c.l.b16 %v207
        %v276 = vunpack.c.l.b16 %v208
        %v277 = vunpack.c.l.b16 %v209
        %v278 = vunpack.c.l.b16 %v210
        %v279 = vunpack.c.l.b16 %v211
        %v280 = vunpack.c.l.b16 %v212
        %v281 = vunpack.c.l.b16 %v213
        %v282 = vunpack.c.l.b16 %v214
        %v283 = vunpack.c.l.b16 %v215
        %v284 = vunpack.c.l.b16 %v216
        %v285 = vunpack.c.l.b16 %v217
        %v286 = vunpack.c.l.b16 %v218
        %v287 = vunpack.c.l.b16 %v219
        %v288 = vunpack.c.l.b16 %v220
        %v289 = vunpack.c.l.b16 %v221
        %v290 = vunpack.c.l.b16 %v222
        %v291 = vunpack.c.l.b16 %v223
        %v292 = vunpack.c.l.b16 %v224
        %v293 = vunpack.c.l.b16 %v225
        %v294 = vunpack.c.l.b16 %v226
        %v295 = vunpack.c.l.b16 %v227
        %v296 = vunpack.c.l.b16 %v228
        %v297 = vunpack.c.l.b16 %v229
        %v298 = vunpack.c.l.b16 %v230
        %v299 = vunpack.c.l.b16 %v231
        %v300 = vpack.c.b16 %v269, %v268
        %v301 = vpack.c.b16 %v271, %v270
        %v302 = vpack.c.b16 %v273, %v272
        %v303 = vpack.c.b16 %v275, %v274
        %v304 = vpack.c.b16 %v277, %v276
        %v305 = vpack.c.b16 %v279, %v278
        %v306 = vpack.c.b16 %v281, %v280
        %v307 = vpack.c.b16 %v283, %v282
        %v308 = vpack.c.b16 %v285, %v284
        %v309 = vpack.c.b16 %v287, %v286
        %v310 = vpack.c.b16 %v289, %v288
        %v311 = vpack.c.b16 %v291, %v290
        %v312 = vpack.c.b16 %v293, %v292
        %v313 = vpack.c.b16 %v295, %v294
        %v314 = vpack.c.b16 %v297, %v296
        %v315 = vpack.c.b16 %v299, %v298
        %v320 = vunpack.c.l.b16 %v232
        %v321 = vunpack.c.l.b16 %v233
        %v322 = vunpack.c.l.b16 %v234
        %v323 = vunpack.c.l.b16 %v235
        %v324 = vpack.c.b16 %v321, %v320
        %v325 = vpack.c.b16 %v323, %v322
        %vm328 = vcmask 261120
        %v330 = vsel %vm328, %v300, 0
        %v333 = vsel %vm328, %v301, 0
        %v336 = vsel %vm328, %v302, 0
        %v339 = vsel %vm328, %v303, 0
        %v342 = vsel %vm328, %v304, 0
        %v345 = vsel %vm328, %v305, 0
        %v348 = vsel %vm328, %v306, 0
        %v351 = vsel %vm328, %v307, 0
        %v354 = vsel %vm328, %v308, 0
        %v357 = vsel %vm328, %v309, 0
        %v360 = vsel %vm328, %v310, 0
        %v363 = vsel %vm328, %v311, 0
        %v366 = vsel %vm328, %v312, 0
        %v369 = vsel %vm328, %v313, 0
        %v372 = vsel %vm328, %v314, 0
        %v375 = vsel %vm328, %v315, 0
        %377 = vmatprep.subr.bf16.mxu0 0
        %378 = vmatpush1.bf16.msra.mxu0 %v324
        %379 = vmatprep.subr.bf16.mxu0 0
        %380 = vmatpush1.bf16.msra.mxu0 %v325
        %381 = vmatprep.subr.bf16.mxu0 0
        %382 = vmatpush1.bf16.msra.mxu0 0
        %383 = vmatprep.subr.bf16.mxu0 0
        %384 = vmatpush1.bf16.msra.mxu0 0
        %385 = vmatprep.subr.bf16.mxu0 0
        %386 = vmatpush1.bf16.msra.mxu0 0
        %387 = vmatprep.subr.bf16.mxu0 0
        %388 = vmatpush1.bf16.msra.mxu0 0
        %389 = vmatprep.subr.bf16.mxu0 0
        %390 = vmatpush1.bf16.msra.mxu0 0
        %391 = vmatprep.subr.bf16.mxu0 0
        %392 = vmatpush1.bf16.msra.mxu0 0
        %393 = vmatprep.subr.bf16.mxu0 0
        %394 = vmatpush1.bf16.msra.mxu0 0
        %395 = vmatprep.subr.bf16.mxu0 0
        %396 = vmatpush1.bf16.msra.mxu0 0
        %397 = vmatprep.subr.bf16.mxu0 0
        %398 = vmatpush1.bf16.msra.mxu0 0
        %399 = vmatprep.subr.bf16.mxu0 0
        %400 = vmatpush1.bf16.msra.mxu0 0
        %401 = vmatprep.subr.bf16.mxu0 0
        %402 = vmatpush1.bf16.msra.mxu0 0
        %403 = vmatprep.subr.bf16.mxu0 0
        %404 = vmatpush1.bf16.msra.mxu0 0
        %405 = vmatprep.subr.bf16.mxu0 0
        %406 = vmatpush1.bf16.msra.mxu0 0
        %407 = vmatprep.subr.bf16.mxu0 0
        %408 = vmatpush1.bf16.msra.mxu0 0
        %409 = vmatprep.mubr.bf16.mxu0 0
        %410 = vmatmul.mubr.bf16.gmra.mrb[0].mxu0 %v330
        %v411 = vpop.f32.mrb[0].mxu0
        %v412 = vadd.f32 0.0, %v411
        %v413 = vpop.f32.mrb[0].mxu0
        %v414 = vpop.f32.mrb[0].mxu0
        %v415 = vadd.f32 0.0, %v414
        %v416 = vpop.f32.mrb[0].mxu0
        %417 = vmatprep.mubr.bf16.mxu0 0
        %418 = vmatmul.mubr.bf16.gmra.mrb[0].mxu0 %v333
        %v419 = vpop.f32.mrb[0].mxu0
        %v420 = vadd.f32 0.0, %v419
        %v421 = vpop.f32.mrb[0].mxu0
        %v422 = vpop.f32.mrb[0].mxu0
        %v423 = vadd.f32 0.0, %v422
        %v424 = vpop.f32.mrb[0].mxu0
        %425 = vmatprep.mubr.bf16.mxu0 0
        %426 = vmatmul.mubr.bf16.gmra.mrb[0].mxu0 %v336
        %v427 = vpop.f32.mrb[0].mxu0
        %v428 = vadd.f32 0.0, %v427
        %v429 = vpop.f32.mrb[0].mxu0
        %v430 = vpop.f32.mrb[0].mxu0
        %v431 = vadd.f32 0.0, %v430
        %v432 = vpop.f32.mrb[0].mxu0
        %433 = vmatprep.mubr.bf16.mxu0 0
        %434 = vmatmul.mubr.bf16.gmra.mrb[0].mxu0 %v339
        %v435 = vpop.f32.mrb[0].mxu0
        %v436 = vadd.f32 0.0, %v435
        %v437 = vpop.f32.mrb[0].mxu0
        %v438 = vpop.f32.mrb[0].mxu0
        %v439 = vadd.f32 0.0, %v438
        %v440 = vpop.f32.mrb[0].mxu0
        %441 = vmatprep.mubr.bf16.mxu0 0
        %442 = vmatmul.mubr.bf16.gmra.mrb[0].mxu0 %v342
        %v443 = vpop.f32.mrb[0].mxu0
        %v444 = vadd.f32 0.0, %v443
        %v445 = vpop.f32.mrb[0].mxu0
        %v446 = vpop.f32.mrb[0].mxu0
        %v447 = vadd.f32 0.0, %v446
        %v448 = vpop.f32.mrb[0].mxu0
        %449 = vmatprep.mubr.bf16.mxu0 0
        %450 = vmatmul.mubr.bf16.gmra.mrb[0].mxu0 %v345
        %v451 = vpop.f32.mrb[0].mxu0
        %v452 = vadd.f32 0.0, %v451
        %v453 = vpop.f32.mrb[0].mxu0
        %v454 = vpop.f32.mrb[0].mxu0
        %v455 = vadd.f32 0.0, %v454
        %v456 = vpop.f32.mrb[0].mxu0
        %457 = vmatprep.mubr.bf16.mxu0 0
        %458 = vmatmul.mubr.bf16.gmra.mrb[0].mxu0 %v348
        %v459 = vpop.f32.mrb[0].mxu0
        %v460 = vadd.f32 0.0, %v459
        %v461 = vpop.f32.mrb[0].mxu0
        %v462 = vpop.f32.mrb[0].mxu0
        %v463 = vadd.f32 0.0, %v462
        %v464 = vpop.f32.mrb[0].mxu0
        %465 = vmatprep.mubr.bf16.mxu0 0
        %466 = vmatmul.mubr.bf16.gmra.mrb[0].mxu0 %v351
        %v467 = vpop.f32.mrb[0].mxu0
        %v468 = vadd.f32 0.0, %v467
        %v469 = vpop.f32.mrb[0].mxu0
        %v470 = vpop.f32.mrb[0].mxu0
        %v471 = vadd.f32 0.0, %v470
        %v472 = vpop.f32.mrb[0].mxu0
        %473 = vmatprep.mubr.bf16.mxu0 0
        %474 = vmatmul.mubr.bf16.gmra.mrb[0].mxu0 %v354
        %v475 = vpop.f32.mrb[0].mxu0
        %v476 = vadd.f32 0.0, %v475
        %v477 = vpop.f32.mrb[0].mxu0
        %v478 = vpop.f32.mrb[0].mxu0
        %v479 = vadd.f32 0.0, %v478
        %v480 = vpop.f32.mrb[0].mxu0
        %481 = vmatprep.mubr.bf16.mxu0 0
        %482 = vmatmul.mubr.bf16.gmra.mrb[0].mxu0 %v357
        %v483 = vpop.f32.mrb[0].mxu0
        %v484 = vadd.f32 0.0, %v483
        %v485 = vpop.f32.mrb[0].mxu0
        %v486 = vpop.f32.mrb[0].mxu0
        %v487 = vadd.f32 0.0, %v486
        %v488 = vpop.f32.mrb[0].mxu0
        %489 = vmatprep.mubr.bf16.mxu0 0
        %490 = vmatmul.mubr.bf16.gmra.mrb[0].mxu0 %v360
        %v491 = vpop.f32.mrb[0].mxu0
        %v492 = vadd.f32 0.0, %v491
        %v493 = vpop.f32.mrb[0].mxu0
        %v494 = vpop.f32.mrb[0].mxu0
        %v495 = vadd.f32 0.0, %v494
        %v496 = vpop.f32.mrb[0].mxu0
        %497 = vmatprep.mubr.bf16.mxu0 0
        %498 = vmatmul.mubr.bf16.gmra.mrb[0].mxu0 %v363
        %v499 = vpop.f32.mrb[0].mxu0
        %v500 = vadd.f32 0.0, %v499
        %v501 = vpop.f32.mrb[0].mxu0
        %v502 = vpop.f32.mrb[0].mxu0
        %v503 = vadd.f32 0.0, %v502
        %v504 = vpop.f32.mrb[0].mxu0
        %505 = vmatprep.mubr.bf16.mxu0 0
        %506 = vmatmul.mubr.bf16.gmra.mrb[0].mxu0 %v366
        %v507 = vpop.f32.mrb[0].mxu0
        %v508 = vadd.f32 0.0, %v507
        %v509 = vpop.f32.mrb[0].mxu0
        %v510 = vpop.f32.mrb[0].mxu0
        %v511 = vadd.f32 0.0, %v510
        %v512 = vpop.f32.mrb[0].mxu0
        %513 = vmatprep.mubr.bf16.mxu0 0
        %514 = vmatmul.mubr.bf16.gmra.mrb[0].mxu0 %v369
        %v515 = vpop.f32.mrb[0].mxu0
        %v516 = vadd.f32 0.0, %v515
        %v517 = vpop.f32.mrb[0].mxu0
        %v518 = vpop.f32.mrb[0].mxu0
        %v519 = vadd.f32 0.0, %v518
        %v520 = vpop.f32.mrb[0].mxu0
        %521 = vmatprep.mubr.bf16.mxu0 0
        %522 = vmatmul.mubr.bf16.gmra.mrb[0].mxu0 %v372
        %v523 = vpop.f32.mrb[0].mxu0
        %v524 = vadd.f32 0.0, %v523
        %v525 = vpop.f32.mrb[0].mxu0
        %v526 = vpop.f32.mrb[0].mxu0
        %v527 = vadd.f32 0.0, %v526
        %v528 = vpop.f32.mrb[0].mxu0
        %529 = vmatprep.mubr.bf16.mxu0 0
        %530 = vmatmul.mubr.bf16.gmra.mrb[0].mxu0 %v375
        %v531 = vpop.f32.mrb[0].mxu0
        %v532 = vadd.f32 0.0, %v531
        %v533 = vpop.f32.mrb[0].mxu0
        %v534 = vpop.f32.mrb[0].mxu0
        %v535 = vadd.f32 0.0, %v534
        %v536 = vpop.f32.mrb[0].mxu0
        %537 = vdwg.mxu0
        %v538 = vld [vmem:[%s2] sm:$0x1]
        %v540 = vlaneseq
        %v541 = vshrl.u32 %v540, 7
        %v542 = vsub.s32 0, %v541
        %v543 = vrot.slane %v538, %v542
        %v545 = vmul.f32 %v412, %v543
        %v546 = vmul.f32 %v415, %v543
        %v547 = vmul.f32 %v420, %v543
        %v548 = vmul.f32 %v423, %v543
        %v549 = vmul.f32 %v428, %v543
        %v550 = vmul.f32 %v431, %v543
        %v551 = vmul.f32 %v436, %v543
        %v552 = vmul.f32 %v439, %v543
        %v553 = vmul.f32 %v444, %v543
        %v554 = vmul.f32 %v447, %v543
        %v555 = vmul.f32 %v452, %v543
        %v556 = vmul.f32 %v455, %v543
        %v557 = vmul.f32 %v460, %v543
        %v558 = vmul.f32 %v463, %v543
        %v559 = vmul.f32 %v468, %v543
        %v560 = vmul.f32 %v471, %v543
        %v561 = vmul.f32 %v476, %v543
        %v562 = vmul.f32 %v479, %v543
        %v563 = vmul.f32 %v484, %v543
        %v564 = vmul.f32 %v487, %v543
        %v565 = vmul.f32 %v492, %v543
        %v566 = vmul.f32 %v495, %v543
        %v567 = vmul.f32 %v500, %v543
        %v568 = vmul.f32 %v503, %v543
        %v569 = vmul.f32 %v508, %v543
        %v570 = vmul.f32 %v511, %v543
        %v571 = vmul.f32 %v516, %v543
        %v572 = vmul.f32 %v519, %v543
        %v573 = vmul.f32 %v524, %v543
        %v574 = vmul.f32 %v527, %v543
        %v575 = vmul.f32 %v532, %v543
        %v576 = vmul.f32 %v535, %v543
        %v577 = vld [vmem:[%s3] sm:$0x1]
        %v579 = vlaneseq
        %v580 = vshrl.u32 %v579, 7
        %v581 = vsub.s32 0, %v580
        %v582 = vrot.slane %v577, %v581
        %v584 = vadd.f32 %v545, %v582
        %v585 = vadd.f32 %v546, %v582
        %v586 = vadd.f32 %v547, %v582
        %v587 = vadd.f32 %v548, %v582
        %v588 = vadd.f32 %v549, %v582
        %v589 = vadd.f32 %v550, %v582
        %v590 = vadd.f32 %v551, %v582
        %v591 = vadd.f32 %v552, %v582
        %v592 = vadd.f32 %v553, %v582
        %v593 = vadd.f32 %v554, %v582
        %v594 = vadd.f32 %v555, %v582
        %v595 = vadd.f32 %v556, %v582
        %v596 = vadd.f32 %v557, %v582
        %v597 = vadd.f32 %v558, %v582
        %v598 = vadd.f32 %v559, %v582
        %v599 = vadd.f32 %v560, %v582
        %v600 = vadd.f32 %v561, %v582
        %v601 = vadd.f32 %v562, %v582
        %v602 = vadd.f32 %v563, %v582
        %v603 = vadd.f32 %v564, %v582
        %v604 = vadd.f32 %v565, %v582
        %v605 = vadd.f32 %v566, %v582
        %v606 = vadd.f32 %v567, %v582
        %v607 = vadd.f32 %v568, %v582
        %v608 = vadd.f32 %v569, %v582
        %v609 = vadd.f32 %v570, %v582
        %v610 = vadd.f32 %v571, %v582
        %v611 = vadd.f32 %v572, %v582
        %v612 = vadd.f32 %v573, %v582
        %v613 = vadd.f32 %v574, %v582
        %v614 = vadd.f32 %v575, %v582
        %v615 = vadd.f32 %v576, %v582
        %v616 = vxor.u32 %v584, 2147483648
        %v617 = vxor.u32 %v585, 2147483648
        %v618 = vxor.u32 %v586, 2147483648
        %v619 = vxor.u32 %v587, 2147483648
        %v620 = vxor.u32 %v588, 2147483648
        %v621 = vxor.u32 %v589, 2147483648
        %v622 = vxor.u32 %v590, 2147483648
        %v623 = vxor.u32 %v591, 2147483648
        %v624 = vxor.u32 %v592, 2147483648
        %v625 = vxor.u32 %v593, 2147483648
        %v626 = vxor.u32 %v594, 2147483648
        %v627 = vxor.u32 %v595, 2147483648
        %v628 = vxor.u32 %v596, 2147483648
        %v629 = vxor.u32 %v597, 2147483648
        %v630 = vxor.u32 %v598, 2147483648
        %v631 = vxor.u32 %v599, 2147483648
        %v632 = vxor.u32 %v600, 2147483648
        %v633 = vxor.u32 %v601, 2147483648
        %v634 = vxor.u32 %v602, 2147483648
        %v635 = vxor.u32 %v603, 2147483648
        %v636 = vxor.u32 %v604, 2147483648
        %v637 = vxor.u32 %v605, 2147483648
        %v638 = vxor.u32 %v606, 2147483648
        %v639 = vxor.u32 %v607, 2147483648
        %v640 = vxor.u32 %v608, 2147483648
        %v641 = vxor.u32 %v609, 2147483648
        %v642 = vxor.u32 %v610, 2147483648
        %v643 = vxor.u32 %v611, 2147483648
        %v644 = vxor.u32 %v612, 2147483648
        %v645 = vxor.u32 %v613, 2147483648
        %v646 = vxor.u32 %v614, 2147483648
        %v647 = vxor.u32 %v615, 2147483648
        %v648 = vmul.f32 %v616, 1.442695
        %v649 = vpow.pop %v648
        %v650 = vmul.f32 %v617, 1.442695
        %v651 = vpow.pop %v650
        %v652 = vmul.f32 %v618, 1.442695
        %v653 = vpow.pop %v652
        %v654 = vmul.f32 %v619, 1.442695
        %v655 = vpow.pop %v654
        %v656 = vmul.f32 %v620, 1.442695
        %v657 = vpow.pop %v656
        %v658 = vmul.f32 %v621, 1.442695
        %v659 = vpow.pop %v658
        %v660 = vmul.f32 %v622, 1.442695
        %v661 = vpow.pop %v660
        %v662 = vmul.f32 %v623, 1.442695
        %v663 = vpow.pop %v662
        %v664 = vmul.f32 %v624, 1.442695
        %v665 = vpow.pop %v664
        %v666 = vmul.f32 %v625, 1.442695
        %v667 = vpow.pop %v666
        %v668 = vmul.f32 %v626, 1.442695
        %v669 = vpow.pop %v668
        %v670 = vmul.f32 %v627, 1.442695
        %v671 = vpow.pop %v670
        %v672 = vmul.f32 %v628, 1.442695
        %v673 = vpow.pop %v672
        %v674 = vmul.f32 %v629, 1.442695
        %v675 = vpow.pop %v674
        %v676 = vmul.f32 %v630, 1.442695
        %v677 = vpow.pop %v676
        %v678 = vmul.f32 %v631, 1.442695
        %v679 = vpow.pop %v678
        %v680 = vmul.f32 %v632, 1.442695
        %v681 = vpow.pop %v680
        %v682 = vmul.f32 %v633, 1.442695
        %v683 = vpow.pop %v682
        %v684 = vmul.f32 %v634, 1.442695
        %v685 = vpow.pop %v684
        %v686 = vmul.f32 %v635, 1.442695
        %v687 = vpow.pop %v686
        %v688 = vmul.f32 %v636, 1.442695
        %v689 = vpow.pop %v688
        %v690 = vmul.f32 %v637, 1.442695
        %v691 = vpow.pop %v690
        %v692 = vmul.f32 %v638, 1.442695
        %v693 = vpow.pop %v692
        %v694 = vmul.f32 %v639, 1.442695
        %v695 = vpow.pop %v694
        %v696 = vmul.f32 %v640, 1.442695
        %v697 = vpow.pop %v696
        %v698 = vmul.f32 %v641, 1.442695
        %v699 = vpow.pop %v698
        %v700 = vmul.f32 %v642, 1.442695
        %v701 = vpow.pop %v700
        %v702 = vmul.f32 %v643, 1.442695
        %v703 = vpow.pop %v702
        %v704 = vmul.f32 %v644, 1.442695
        %v705 = vpow.pop %v704
        %v706 = vmul.f32 %v645, 1.442695
        %v707 = vpow.pop %v706
        %v708 = vmul.f32 %v646, 1.442695
        %v709 = vpow.pop %v708
        %v710 = vmul.f32 %v647, 1.442695
        %v711 = vpow.pop %v710
        %v712 = vadd.f32 %v649, 1.0
        %v713 = vadd.f32 %v651, 1.0
        %v714 = vadd.f32 %v653, 1.0
        %v715 = vadd.f32 %v655, 1.0
        %v716 = vadd.f32 %v657, 1.0
        %v717 = vadd.f32 %v659, 1.0
        %v718 = vadd.f32 %v661, 1.0
        %v719 = vadd.f32 %v663, 1.0
        %v720 = vadd.f32 %v665, 1.0
        %v721 = vadd.f32 %v667, 1.0
        %v722 = vadd.f32 %v669, 1.0
        %v723 = vadd.f32 %v671, 1.0
        %v724 = vadd.f32 %v673, 1.0
        %v725 = vadd.f32 %v675, 1.0
        %v726 = vadd.f32 %v677, 1.0
        %v727 = vadd.f32 %v679, 1.0
        %v728 = vadd.f32 %v681, 1.0
        %v729 = vadd.f32 %v683, 1.0
        %v730 = vadd.f32 %v685, 1.0
        %v731 = vadd.f32 %v687, 1.0
        %v732 = vadd.f32 %v689, 1.0
        %v733 = vadd.f32 %v691, 1.0
        %v734 = vadd.f32 %v693, 1.0
        %v735 = vadd.f32 %v695, 1.0
        %v736 = vadd.f32 %v697, 1.0
        %v737 = vadd.f32 %v699, 1.0
        %v738 = vadd.f32 %v701, 1.0
        %v739 = vadd.f32 %v703, 1.0
        %v740 = vadd.f32 %v705, 1.0
        %v741 = vadd.f32 %v707, 1.0
        %v742 = vadd.f32 %v709, 1.0
        %v743 = vadd.f32 %v711, 1.0
        %v744 = vrcp.pop %v712
        %v745 = vmul.f32 1.0, %v744
        %v746 = vrcp.pop %v713
        %v747 = vmul.f32 1.0, %v746
        %v748 = vrcp.pop %v714
        %v749 = vmul.f32 1.0, %v748
        %v750 = vrcp.pop %v715
        %v751 = vmul.f32 1.0, %v750
        %v752 = vrcp.pop %v716
        %v753 = vmul.f32 1.0, %v752
        %v754 = vrcp.pop %v717
        %v755 = vmul.f32 1.0, %v754
        %v756 = vrcp.pop %v718
        %v757 = vmul.f32 1.0, %v756
        %v758 = vrcp.pop %v719
        %v759 = vmul.f32 1.0, %v758
        %v760 = vrcp.pop %v720
        %v761 = vmul.f32 1.0, %v760
        %v762 = vrcp.pop %v721
        %v763 = vmul.f32 1.0, %v762
        %v764 = vrcp.pop %v722
        %v765 = vmul.f32 1.0, %v764
        %v766 = vrcp.pop %v723
        %v767 = vmul.f32 1.0, %v766
        %v768 = vrcp.pop %v724
        %v769 = vmul.f32 1.0, %v768
        %v770 = vrcp.pop %v725
        %v771 = vmul.f32 1.0, %v770
        %v772 = vrcp.pop %v726
        %v773 = vmul.f32 1.0, %v772
        %v774 = vrcp.pop %v727
        %v775 = vmul.f32 1.0, %v774
        %v776 = vrcp.pop %v728
        %v777 = vmul.f32 1.0, %v776
        %v778 = vrcp.pop %v729
        %v779 = vmul.f32 1.0, %v778
        %v780 = vrcp.pop %v730
        %v781 = vmul.f32 1.0, %v780
        %v782 = vrcp.pop %v731
        %v783 = vmul.f32 1.0, %v782
        %v784 = vrcp.pop %v732
        %v785 = vmul.f32 1.0, %v784
        %v786 = vrcp.pop %v733
        %v787 = vmul.f32 1.0, %v786
        %v788 = vrcp.pop %v734
        %v789 = vmul.f32 1.0, %v788
        %v790 = vrcp.pop %v735
        %v791 = vmul.f32 1.0, %v790
        %v792 = vrcp.pop %v736
        %v793 = vmul.f32 1.0, %v792
        %v794 = vrcp.pop %v737
        %v795 = vmul.f32 1.0, %v794
        %v796 = vrcp.pop %v738
        %v797 = vmul.f32 1.0, %v796
        %v798 = vrcp.pop %v739
        %v799 = vmul.f32 1.0, %v798
        %v800 = vrcp.pop %v740
        %v801 = vmul.f32 1.0, %v800
        %v802 = vrcp.pop %v741
        %v803 = vmul.f32 1.0, %v802
        %v804 = vrcp.pop %v742
        %v805 = vmul.f32 1.0, %v804
        %v806 = vrcp.pop %v743
        %v807 = vmul.f32 1.0, %v806
        %v808 = vmul.f32 %v584, %v745
        %v809 = vmul.f32 %v585, %v747
        %v810 = vmul.f32 %v586, %v749
        %v811 = vmul.f32 %v587, %v751
        %v812 = vmul.f32 %v588, %v753
        %v813 = vmul.f32 %v589, %v755
        %v814 = vmul.f32 %v590, %v757
        %v815 = vmul.f32 %v591, %v759
        %v816 = vmul.f32 %v592, %v761
        %v817 = vmul.f32 %v593, %v763
        %v818 = vmul.f32 %v594, %v765
        %v819 = vmul.f32 %v595, %v767
        %v820 = vmul.f32 %v596, %v769
        %v821 = vmul.f32 %v597, %v771
        %v822 = vmul.f32 %v598, %v773
        %v823 = vmul.f32 %v599, %v775
        %v824 = vmul.f32 %v600, %v777
        %v825 = vmul.f32 %v601, %v779
        %v826 = vmul.f32 %v602, %v781
        %v827 = vmul.f32 %v603, %v783
        %v828 = vmul.f32 %v604, %v785
        %v829 = vmul.f32 %v605, %v787
        %v830 = vmul.f32 %v606, %v789
        %v831 = vmul.f32 %v607, %v791
        %v832 = vmul.f32 %v608, %v793
        %v833 = vmul.f32 %v609, %v795
        %v834 = vmul.f32 %v610, %v797
        %v835 = vmul.f32 %v611, %v799
        %v836 = vmul.f32 %v612, %v801
        %v837 = vmul.f32 %v613, %v803
        %v838 = vmul.f32 %v614, %v805
        %v839 = vmul.f32 %v615, %v807
        %v840 = vpack.c.bf16 %v809, %v808
        %v841 = vpack.c.bf16 %v811, %v810
        %v842 = vpack.c.bf16 %v813, %v812
        %v843 = vpack.c.bf16 %v815, %v814
        %v844 = vpack.c.bf16 %v817, %v816
        %v845 = vpack.c.bf16 %v819, %v818
        %v846 = vpack.c.bf16 %v821, %v820
        %v847 = vpack.c.bf16 %v823, %v822
        %v848 = vpack.c.bf16 %v825, %v824
        %v849 = vpack.c.bf16 %v827, %v826
        %v850 = vpack.c.bf16 %v829, %v828
        %v851 = vpack.c.bf16 %v831, %v830
        %v852 = vpack.c.bf16 %v833, %v832
        %v853 = vpack.c.bf16 %v835, %v834
        %v854 = vpack.c.bf16 %v837, %v836
        %v855 = vpack.c.bf16 %v839, %v838
        %v872 = vunpack.c.l.b16 %v840
        %v873 = vunpack.c.h.b16 %v840
        %v874 = vunpack.c.l.b16 %v841
        %v875 = vunpack.c.h.b16 %v841
        %v876 = vunpack.c.l.b16 %v842
        %v877 = vunpack.c.h.b16 %v842
        %v878 = vunpack.c.l.b16 %v843
        %v879 = vunpack.c.h.b16 %v843
        %v880 = vunpack.c.l.b16 %v844
        %v881 = vunpack.c.h.b16 %v844
        %v882 = vunpack.c.l.b16 %v845
        %v883 = vunpack.c.h.b16 %v845
        %v884 = vunpack.c.l.b16 %v846
        %v885 = vunpack.c.h.b16 %v846
        %v886 = vunpack.c.l.b16 %v847
        %v887 = vunpack.c.h.b16 %v847
        %v888 = vunpack.c.l.b16 %v848
        %v889 = vunpack.c.h.b16 %v848
        %v890 = vunpack.c.l.b16 %v849
        %v891 = vunpack.c.h.b16 %v849
        %v892 = vunpack.c.l.b16 %v850
        %v893 = vunpack.c.h.b16 %v850
        %v894 = vunpack.c.l.b16 %v851
        %v895 = vunpack.c.h.b16 %v851
        %v896 = vunpack.c.l.b16 %v852
        %v897 = vunpack.c.h.b16 %v852
        %v898 = vunpack.c.l.b16 %v853
        %v899 = vunpack.c.h.b16 %v853
        %v900 = vunpack.c.l.b16 %v854
        %v901 = vunpack.c.h.b16 %v854
        %v902 = vunpack.c.l.b16 %v855
        %v903 = vunpack.c.h.b16 %v855
        %v904 = vpack.c.b16 %v872, %v872
        %v905 = vpack.c.b16 %v873, %v873
        %v906 = vpack.c.b16 %v874, %v874
        %v907 = vpack.c.b16 %v875, %v875
        %v908 = vpack.c.b16 %v876, %v876
        %v909 = vpack.c.b16 %v877, %v877
        %v910 = vpack.c.b16 %v878, %v878
        %v911 = vpack.c.b16 %v879, %v879
        %v912 = vpack.c.b16 %v880, %v880
        %v913 = vpack.c.b16 %v881, %v881
        %v914 = vpack.c.b16 %v882, %v882
        %v915 = vpack.c.b16 %v883, %v883
        %v916 = vpack.c.b16 %v884, %v884
        %v917 = vpack.c.b16 %v885, %v885
        %v918 = vpack.c.b16 %v886, %v886
        %v919 = vpack.c.b16 %v887, %v887
        %v920 = vpack.c.b16 %v888, %v888
        %v921 = vpack.c.b16 %v889, %v889
        %v922 = vpack.c.b16 %v890, %v890
        %v923 = vpack.c.b16 %v891, %v891
        %v924 = vpack.c.b16 %v892, %v892
        %v925 = vpack.c.b16 %v893, %v893
        %v926 = vpack.c.b16 %v894, %v894
        %v927 = vpack.c.b16 %v895, %v895
        %v928 = vpack.c.b16 %v896, %v896
        %v929 = vpack.c.b16 %v897, %v897
        %v930 = vpack.c.b16 %v898, %v898
        %v931 = vpack.c.b16 %v899, %v899
        %v932 = vpack.c.b16 %v900, %v900
        %v933 = vpack.c.b16 %v901, %v901
        %v934 = vpack.c.b16 %v902, %v902
        %v935 = vpack.c.b16 %v903, %v903
        %968 = vst [vmem:[%s191] sm:$0xf] %v904
        %969 = vst [vmem:[%s191 + $0x4] sm:$0xf] %v905
        %970 = vst [vmem:[%s191 + $0x8] sm:$0xf] %v906
        %971 = vst [vmem:[%s191 + $0xc] sm:$0xf] %v907
        %972 = vst [vmem:[%s191 + $0x10] sm:$0xf] %v908
        %973 = vst [vmem:[%s191 + $0x14] sm:$0xf] %v909
        %974 = vst [vmem:[%s191 + $0x18] sm:$0xf] %v910
        %975 = vst [vmem:[%s191 + $0x1c] sm:$0xf] %v911
        %976 = vst [vmem:[%s191 + $0x20] sm:$0xf] %v912
        %977 = vst [vmem:[%s191 + $0x24] sm:$0xf] %v913
        %978 = vst [vmem:[%s191 + $0x28] sm:$0xf] %v914
        %979 = vst [vmem:[%s191 + $0x2c] sm:$0xf] %v915
        %980 = vst [vmem:[%s191 + $0x30] sm:$0xf] %v916
        %981 = vst [vmem:[%s191 + $0x34] sm:$0xf] %v917
        %982 = vst [vmem:[%s191 + $0x38] sm:$0xf] %v918
        %983 = vst [vmem:[%s191 + $0x3c] sm:$0xf] %v919
        %984 = vst [vmem:[%s191 + $0x40] sm:$0xf] %v920
        %985 = vst [vmem:[%s191 + $0x44] sm:$0xf] %v921
        %986 = vst [vmem:[%s191 + $0x48] sm:$0xf] %v922
        %987 = vst [vmem:[%s191 + $0x4c] sm:$0xf] %v923
        %988 = vst [vmem:[%s191 + $0x50] sm:$0xf] %v924
        %989 = vst [vmem:[%s191 + $0x54] sm:$0xf] %v925
        %990 = vst [vmem:[%s191 + $0x58] sm:$0xf] %v926
        %991 = vst [vmem:[%s191 + $0x5c] sm:$0xf] %v927
        %992 = vst [vmem:[%s191 + $0x60] sm:$0xf] %v928
        %993 = vst [vmem:[%s191 + $0x64] sm:$0xf] %v929
        %994 = vst [vmem:[%s191 + $0x68] sm:$0xf] %v930
        %995 = vst [vmem:[%s191 + $0x6c] sm:$0xf] %v931
        %996 = vst [vmem:[%s191 + $0x70] sm:$0xf] %v932
        %997 = vst [vmem:[%s191 + $0x74] sm:$0xf] %v933
        %998 = vst [vmem:[%s191 + $0x78] sm:$0xf] %v934
        %999 = vst [vmem:[%s191 + $0x7c] sm:$0xf] %v935
        %s1000 = sand.u32 %s115, 1
        %s1001 = scalar_lea.sflag [#allocation3], %s1000
        %s1002 = sand.u32 %s115, 1
        %s1003 = smul.addr %s1002, 128
        %s1004 = scalar_lea.vmem [#allocation2], %s1003
        // Predicated region
        $region37: #{tpu_custom_call.1} parent=35 // pred_check
          %p1005 = pneg %p125
        $region38: #{tpu_custom_call.1} parent=35 // pred_check_branch
          %1007 = sbr.rel (%p1005) target = $region40
        $region39: #{tpu_custom_call.1} parent=35 // pred_region
          %s1008 = smul.u32 32, %s18
          %s1010 = ssub.s32 2048, 2048
          %1011 = vsyncadd %s1001, %s1010
          %s1012 = smul.addr %s1008, 64
          %s1013 = scalar_lea.hbm %s4, %s1012
          %s1014 = sshll.u32 %s1004, 4
          %s1015 = int_to_ptr.vmem [resolvable:$true] %s1014
          %1020 = dma.vmem_to_hbm [thread:$0]  %s1015, 2048, %s1013, %s1001, 64, 64, 4
        $region40: #{tpu_custom_call.1} parent=35 // pred_fallthru
          _
      $region36: #{tpu_custom_call.1} parent=5 // pred_fallthru
        _
      %p1021 = scmp.le.s32.totalorder 2, %s13
      // Predicated region
      $region41: #{tpu_custom_call.1} parent=5 // pred_check
        %p1022 = pneg %p1021
      $region42: #{tpu_custom_call.1} parent=5 // pred_check_branch
        %1024 = sbr.rel (%p1022) target = $region44
      $region43: #{tpu_custom_call.1} parent=5 // pred_region
        %s1025 = ssub.s32 %s13, 2
        // Predicated region
        $region45: #{tpu_custom_call.1} parent=43 // pred_check
          %p1026 = pneg %p131
        $region46: #{tpu_custom_call.1} parent=43 // pred_check_branch
          %1028 = sbr.rel (%p1026) target = $region48
        $region47: #{tpu_custom_call.1} parent=43 // pred_region
          %s1029 = sand.u32 %s116, 1
          %s1030 = scalar_lea.sflag [#allocation3], %s1029
          %s1031 = sand.u32 %s116, 1
          %s1032 = smul.addr %s1031, 128
          %s1033 = scalar_lea.vmem [#allocation2], %s1032
          %1034 = dma.done %s1030, 2048
        $region48: #{tpu_custom_call.1} parent=43 // pred_fallthru
          _
      $region44: #{tpu_custom_call.1} parent=5 // pred_fallthru
        _
    $region6: #{tpu_custom_call.1} parent=1 // loop_footer
      %s17 = sadd.s32 1, %s13
    $region7: #{tpu_custom_call.1} parent=1 // loop_footer_branch
      %12 = sbr.rel target = $region3
    $region8: #{tpu_custom_call.1} parent=1 // loop_exit
      _
    %1035 = vsyncpa [#allocation3], 1
    %s1036 = scalar_lea.sflag [#allocation3], 1
    %1037 = vsyncpa %s1036, 1

</llo_original>
